<compile_context>
chip_gen: v5e
topology: v5e:2x2
jax: 0.10.0
libtpu: 0.0.40
codegen_flags: <defaults>
</compile_context>

<pallas_src>
import functools

import jax
import jax.numpy as jnp
from jax.experimental import pallas as pl
from jax.experimental.pallas import tpu as pltpu


def _round_up(n, m):
    return ((n + m - 1) // m) * m


def _classifier_kernel(x_ref, w7_ref, b7_ref, w8_ref, b8_ref, out_ref, *,
                       apply_softmax):
    """relu -> fc7+relu -> fc8 [-> softmax] on one batch tile."""
    # relu on input (f32 epilogue). Dropout(p=0.5) is identity in eval mode.
    # TODO(synk): training-mode stochastic dropout would use pltpu.prng_random_bits.
    h = jnp.maximum(x_ref[...], 0.0)

    # fc7 + relu  (bf16 MXU inputs, f32 accumulate, f32 bias/epilogue)
    h = jnp.dot(h.astype(jnp.bfloat16), w7_ref[...],
                preferred_element_type=jnp.float32) + b7_ref[...]
    h = jnp.maximum(h, 0.0)

    # fc8
    logits = jnp.dot(h.astype(jnp.bfloat16), w8_ref[...],
                     preferred_element_type=jnp.float32) + b8_ref[...]

    if apply_softmax:
        # softmax over the class (lane) axis; padded classes have bias -1e30
        # so exp(logit - m) underflows to exactly 0 for them.
        m = jnp.max(logits, axis=1, keepdims=True)
        e = jnp.exp(logits - m)
        denom = jnp.sum(e, axis=1, keepdims=True)
        out_ref[...] = (e * pl.reciprocal(denom, approx=True)).astype(out_ref.dtype)
    else:
        out_ref[...] = logits.astype(out_ref.dtype)


def classifier_forward(x, w7, b7, w8, b8, *, logits=False, block_batch=128):
    """Classifier forward pass as a single batch-tiled Pallas call.

    x: (B, F) float32; w7: (F, F); b7: (1, F); w8: (F, O); b8: (1, O).
    Returns (B, O) softmax probabilities (or raw logits if logits=True).
    """
    B, F = x.shape
    O = w8.shape[1]

    # Batch tile: multiple of 8 sublanes, at most block_batch rows.
    tm = min(block_batch, _round_up(B, 8))
    b_pad = _round_up(B, tm)
    # Lane-dense output: pad the class axis to a multiple of 128.
    o_pad = _round_up(O, 128)

    x_p = x.astype(jnp.float32)
    if b_pad != B:
        x_p = jnp.pad(x_p, ((0, b_pad - B), (0, 0)))

    # bf16 weights: halves HBM traffic / VMEM footprint, full-rate MXU.
    w7_b = w7.astype(jnp.bfloat16)
    w8_b = w8.astype(jnp.bfloat16)
    b7_p = b7.astype(jnp.float32)
    if o_pad != O:
        w8_b = jnp.pad(w8_b, ((0, 0), (0, o_pad - O)))
        # Padded classes get a hugely negative bias -> zero softmax weight.
        b8_p = jnp.pad(b8.astype(jnp.float32), ((0, 0), (0, o_pad - O)),
                       constant_values=-1e30)
    else:
        b8_p = b8.astype(jnp.float32)

    kernel = functools.partial(_classifier_kernel, apply_softmax=not logits)

    flops = 2 * b_pad * F * F + 2 * b_pad * F * o_pad
    transcendentals = 0 if logits else b_pad * o_pad
    bytes_accessed = (x_p.size * 4 + w7_b.size * 2 + b7_p.size * 4
                      + w8_b.size * 2 + b8_p.size * 4 + b_pad * o_pad * 4)

    out = pl.pallas_call(
        kernel,
        out_shape=jax.ShapeDtypeStruct((b_pad, o_pad), jnp.float32),
        grid_spec=pltpu.PrefetchScalarGridSpec(
            num_scalar_prefetch=0,
            grid=(b_pad // tm,),
            in_specs=[
                pl.BlockSpec((tm, F), lambda i: (i, 0)),       # x streams per tile
                pl.BlockSpec((F, F), lambda i: (0, 0)),        # w7 resident
                pl.BlockSpec((1, F), lambda i: (0, 0)),        # b7 resident
                pl.BlockSpec((F, o_pad), lambda i: (0, 0)),    # w8 resident
                pl.BlockSpec((1, o_pad), lambda i: (0, 0)),    # b8 resident
            ],
            out_specs=pl.BlockSpec((tm, o_pad), lambda i: (i, 0)),
        ),
        compiler_params=pltpu.CompilerParams(
            dimension_semantics=("parallel",),     # shard batch tiles across TCs
            vmem_limit_bytes=32 * 1024 * 1024,
        ),
        cost_estimate=pl.CostEstimate(
            flops=flops,
            transcendentals=transcendentals,
            bytes_accessed=bytes_accessed,
        ),
    )(x_p, w7_b, b7_p, w8_b, b8_p)

    return out[:B, :O]


def init_params(key, feature, out_f):
    """Deterministic init matching nn.Linear default: U(-1/sqrt(fan_in), +)."""
    k7w, k7b, k8w, k8b = jax.random.split(key, 4)
    bound = 1.0 / jnp.sqrt(feature)
    w7 = jax.random.uniform(k7w, (feature, feature), jnp.float32, -bound, bound)
    b7 = jax.random.uniform(k7b, (1, feature), jnp.float32, -bound, bound)
    w8 = jax.random.uniform(k8w, (feature, out_f), jnp.float32, -bound, bound)
    b8 = jax.random.uniform(k8b, (1, out_f), jnp.float32, -bound, bound)
    return w7, b7, w8, b8


def reference_forward(x, w7, b7, w8, b8, *, logits=False):
    """Pure-JAX reference using the same bf16-input / f32-accumulate matmuls."""
    h = jnp.maximum(x, 0.0)
    h = jnp.dot(h.astype(jnp.bfloat16), w7.astype(jnp.bfloat16),
                preferred_element_type=jnp.float32) + b7
    h = jnp.maximum(h, 0.0)
    out = jnp.dot(h.astype(jnp.bfloat16), w8.astype(jnp.bfloat16),
                  preferred_element_type=jnp.float32) + b8
    if logits:
        return out
    return jax.nn.softmax(out, axis=1)


if __name__ == "__main__":
    key = jax.random.PRNGKey(0)
    kx, kp = jax.random.split(key)

    batch, feature, out_f = 8, 32, 16
    x = jax.random.normal(kx, (batch, feature), dtype=jnp.float32)
    w7, b7, w8, b8 = init_params(kp, feature, out_f)

    # softmax path
    probs = jax.block_until_ready(
        classifier_forward(x, w7, b7, w8, b8, logits=False))
    ref_p = reference_forward(x, w7, b7, w8, b8, logits=False)
    assert probs.shape == (batch, out_f)
    assert jnp.allclose(probs, ref_p, atol=5e-3, rtol=5e-3), "softmax mismatch vs reference"
    # approx reciprocal -> rows sum to 1 only to ~1e-3
    assert jnp.allclose(jnp.sum(probs, axis=1), 1.0, atol=5e-3), "softmax rows should sum to ~1"

    # logits path (same kernel body, softmax disabled)
    lg = jax.block_until_ready(
        classifier_forward(x, w7, b7, w8, b8, logits=True))
    ref_l = reference_forward(x, w7, b7, w8, b8, logits=True)
    assert lg.shape == (batch, out_f)
    assert jnp.allclose(lg, ref_l, atol=1e-3, rtol=1e-3), "logits mismatch vs reference"

    print("KERNEL_OK")
</pallas_src>

<mosaic_0001>
module attributes {stable_mosaic.version = 11 : i64} {
  func.func @_classifier_kernel(%arg0: i32, %arg1: memref<8x32xf32, #tpu.memory_space<vmem>>, %arg2: memref<32x32xbf16, #tpu.memory_space<vmem>>, %arg3: memref<1x32xf32, #tpu.memory_space<vmem>>, %arg4: memref<32x128xbf16, #tpu.memory_space<vmem>>, %arg5: memref<1x128xf32, #tpu.memory_space<vmem>>, %arg6: memref<8x128xf32, #tpu.memory_space<vmem>>) attributes {dimension_semantics = [#tpu.dimension_semantics<parallel>], iteration_bounds = array<i64: 1>, scalar_prefetch = 0 : i64, scratch_operands = 0 : i64, tpu.core_type = #tpu.core_type<tc>, window_params = [{transform_indices = @transform_0, window_bounds = array<i64: 8, 32>}, {pipeline_mode = #tpu.pipeline_mode<synchronous>, transform_indices = @transform_1, window_bounds = array<i64: 32, 32>}, {pipeline_mode = #tpu.pipeline_mode<synchronous>, transform_indices = @transform_2, window_bounds = array<i64: 1, 32>}, {pipeline_mode = #tpu.pipeline_mode<synchronous>, transform_indices = @transform_3, window_bounds = array<i64: 32, 128>}, {pipeline_mode = #tpu.pipeline_mode<synchronous>, transform_indices = @transform_4, window_bounds = array<i64: 1, 128>}, {transform_indices = @transform_5, window_bounds = array<i64: 8, 128>}]} {
    %c0 = arith.constant 0 : index
    %c0_0 = arith.constant 0 : index
    %0 = vector.load %arg1[%c0, %c0_0] : memref<8x32xf32, #tpu.memory_space<vmem>>, vector<8x32xf32>
    %cst = arith.constant 0.000000e+00 : f32
    %1 = vector.broadcast %cst : f32 to vector<8x32xf32>
    %2 = arith.maximumf %0, %1 : vector<8x32xf32>
    %3 = arith.truncf %2 : vector<8x32xf32> to vector<8x32xbf16>
    %c0_1 = arith.constant 0 : index
    %c0_2 = arith.constant 0 : index
    %4 = vector.load %arg2[%c0_1, %c0_2] : memref<32x32xbf16, #tpu.memory_space<vmem>>, vector<32x32xbf16>
    %cst_3 = arith.constant dense<0.000000e+00> : vector<8x32xf32>
    %5 = tpu.matmul %3, %4, %cst_3 {dimension_numbers = #tpu.dot_dimension_numbers<[1], [0], [0], [1], [0, 0, 1, 1], [], []>} : vector<8x32xbf16>, vector<32x32xbf16>, vector<8x32xf32> -> vector<8x32xf32>
    %c0_4 = arith.constant 0 : index
    %c0_5 = arith.constant 0 : index
    %6 = vector.load %arg3[%c0_4, %c0_5] : memref<1x32xf32, #tpu.memory_space<vmem>>, vector<1x32xf32>
    %7 = vector.broadcast %6 : vector<1x32xf32> to vector<8x32xf32>
    %8 = arith.addf %5, %7 : vector<8x32xf32>
    %cst_6 = arith.constant 0.000000e+00 : f32
    %9 = vector.broadcast %cst_6 : f32 to vector<8x32xf32>
    %10 = arith.maximumf %8, %9 : vector<8x32xf32>
    %11 = arith.truncf %10 : vector<8x32xf32> to vector<8x32xbf16>
    %c0_7 = arith.constant 0 : index
    %c0_8 = arith.constant 0 : index
    %12 = vector.load %arg4[%c0_7, %c0_8] : memref<32x128xbf16, #tpu.memory_space<vmem>>, vector<32x128xbf16>
    %cst_9 = arith.constant dense<0.000000e+00> : vector<8x128xf32>
    %13 = tpu.matmul %11, %12, %cst_9 {dimension_numbers = #tpu.dot_dimension_numbers<[1], [0], [0], [1], [0, 0, 1, 1], [], []>} : vector<8x32xbf16>, vector<32x128xbf16>, vector<8x128xf32> -> vector<8x128xf32>
    %c0_10 = arith.constant 0 : index
    %c0_11 = arith.constant 0 : index
    %14 = vector.load %arg5[%c0_10, %c0_11] : memref<1x128xf32, #tpu.memory_space<vmem>>, vector<1x128xf32>
    %15 = vector.broadcast %14 : vector<1x128xf32> to vector<8x128xf32>
    %16 = arith.addf %13, %15 : vector<8x128xf32>
    %cst_12 = arith.constant dense<0xFF800000> : vector<8xf32>
    %17 = vector.multi_reduction <maximumf>, %16, %cst_12 [1] : vector<8x128xf32> to vector<8xf32>
    %18 = vector.shape_cast %17 : vector<8xf32> to vector<8x1xf32>
    %19 = vector.broadcast %18 : vector<8x1xf32> to vector<8x128xf32>
    %20 = arith.subf %16, %19 : vector<8x128xf32>
    %21 = math.exp %20 : vector<8x128xf32>
    %cst_13 = arith.constant dense<0.000000e+00> : vector<8xf32>
    %22 = vector.multi_reduction <add>, %21, %cst_13 [1] : vector<8x128xf32> to vector<8xf32>
    %23 = vector.shape_cast %22 : vector<8xf32> to vector<8x1xf32>
    %24 = tpu.reciprocal %23 {approx = true} : vector<8x1xf32> -> vector<8x1xf32>
    %25 = vector.broadcast %24 : vector<8x1xf32> to vector<8x128xf32>
    %26 = arith.mulf %21, %25 : vector<8x128xf32>
    %c0_14 = arith.constant 0 : index
    %c0_15 = arith.constant 0 : index
    %27 = vector.load %arg6[%c0_14, %c0_15] : memref<8x128xf32, #tpu.memory_space<vmem>>, vector<8x128xf32>
    tpu.vector_store %arg6[%c0_14, %c0_15], %26 {strides = array<i32>} : memref<8x128xf32, #tpu.memory_space<vmem>>, vector<8x128xf32>,
    return
  }
  func.func @transform_0(%arg0: i32) -> (i32, i32) {
    %c0_i32 = arith.constant 0 : i32
    %c0_i32_0 = arith.constant 0 : i32
    return %arg0, %c0_i32 : i32, i32
  }
  func.func @transform_1(%arg0: i32) -> (i32, i32) {
    %c0_i32 = arith.constant 0 : i32
    %c0_i32_0 = arith.constant 0 : i32
    %c0_i32_1 = arith.constant 0 : i32
    return %c0_i32, %c0_i32_0 : i32, i32
  }
  func.func @transform_2(%arg0: i32) -> (i32, i32) {
    %c0_i32 = arith.constant 0 : i32
    %c0_i32_0 = arith.constant 0 : i32
    %c0_i32_1 = arith.constant 0 : i32
    return %c0_i32, %c0_i32_0 : i32, i32
  }
  func.func @transform_3(%arg0: i32) -> (i32, i32) {
    %c0_i32 = arith.constant 0 : i32
    %c0_i32_0 = arith.constant 0 : i32
    %c0_i32_1 = arith.constant 0 : i32
    return %c0_i32, %c0_i32_0 : i32, i32
  }
  func.func @transform_4(%arg0: i32) -> (i32, i32) {
    %c0_i32 = arith.constant 0 : i32
    %c0_i32_0 = arith.constant 0 : i32
    %c0_i32_1 = arith.constant 0 : i32
    return %c0_i32, %c0_i32_0 : i32, i32
  }
  func.func @transform_5(%arg0: i32) -> (i32, i32) {
    %c0_i32 = arith.constant 0 : i32
    %c0_i32_0 = arith.constant 0 : i32
    return %arg0, %c0_i32 : i32, i32
  }
}

</mosaic_0001>

<llo_original>
// kernel: tpu_custom_call.1
$region0: #{tpu_custom_call.1}
  #allocation0 [shape = 'u32[]', space=smem, size = 0x4, offset = 0x4, fixed_abs, tag = 'smem constant byte address 0x4 - core index']
  #allocation1 [shape = 'u32[72,128]{1,0:T(1,128)}', space=vmem, size = 0x9000, scoped, tag = 'internal scratch']
  %s0 = inlined_call_operand.hbm [shape: f32[8,32], index: 0, kind: input, shape index: {}]
  %s1 = inlined_call_operand.hbm [shape: bf16[32,32], index: 1, kind: input, shape index: {}]
  %s2 = inlined_call_operand.vmem [shape: f32[1,32], index: 2, kind: input, shape index: {}]
  %s3 = inlined_call_operand.hbm [shape: bf16[32,128], index: 3, kind: input, shape index: {}]
  %s4 = inlined_call_operand.vmem [shape: f32[1,128], index: 4, kind: input, shape index: {}]
  %s5 = inlined_call_operand.hbm [shape: f32[8,128], index: 5, kind: output, shape index: {}]
  %s6 = sld [smem:[#allocation0]]
  $region42: #{tpu_custom_call.1} parent=0
    _
  %s8 = ssub.s32 1, %s6
  %s9 = scalar_select 0, %s8, %s6
  $region1: #{tpu_custom_call.1} parent=0
    #allocation2 [shape = 'u8[4096]{0}', space=vmem, size = 0x1000, scoped, tag = 'input window, operand 0, single buffered']
    #allocation3 [shape = 's32[1]{0}', space=sflag, size = 0x4, scoped, tag = 'scoped memory for tpu_custom_call.1']
    #allocation4 [shape = 's32[1]{0}', space=sflag, size = 0x4, scoped, tag = 'scoped memory for tpu_custom_call.1']
    #allocation5 [shape = 'u8[8192]{0}', space=vmem, size = 0x2000, scoped, tag = 'input window, operand 1, single buffered']
    #allocation6 [shape = 's32[1]{0}', space=sflag, size = 0x4, scoped, tag = 'scoped memory for tpu_custom_call.1']
    #allocation7 [shape = 'u8[8192]{0}', space=vmem, size = 0x2000, scoped, tag = 'input window, operand 3, single buffered']
    #allocation8 [shape = 'u8[4096]{0}', space=vmem, size = 0x1000, scoped, tag = 'output window, operand 0, single buffered']
    %10 = vsyncpa [#allocation3], 0
    %11 = vsyncpa [#allocation6], 0
    %12 = vsyncpa [#allocation4], 0
    // Predicated region
    $region2: #{tpu_custom_call.1} parent=1 // pred_check
      _
    $region3: #{tpu_custom_call.1} parent=1 // pred_check_branch
      %14 = sbr.rel (0) target = $region5
    $region4: #{tpu_custom_call.1} parent=1 // pred_region
      %16 = vsyncadd [#allocation3], 0
      %s18 = sshll.u32 %s0, 4
      %s19 = int_to_ptr.hbm [resolvable:$true] %s18
      %s20 = sshll.u32 [#allocation2], 4
      %s21 = int_to_ptr.vmem [resolvable:$true] %s20
      %23 = dma.hbm_to_vmem [thread:$0]  %s19, 128, %s21, [#allocation3]
    $region5: #{tpu_custom_call.1} parent=1 // pred_fallthru
      _
    // Predicated region
    $region6: #{tpu_custom_call.1} parent=1 // pred_check
      _
    $region7: #{tpu_custom_call.1} parent=1 // pred_check_branch
      %25 = sbr.rel (0) target = $region9
    $region8: #{tpu_custom_call.1} parent=1 // pred_region
      %27 = vsyncadd [#allocation6], 0
      %s28 = sshll.u32 %s1, 4
      %s29 = int_to_ptr.hbm [resolvable:$true] %s28
      %s30 = sshll.u32 [#allocation5], 4
      %s31 = int_to_ptr.vmem [resolvable:$true] %s30
      %36 = dma.hbm_to_vmem [thread:$0]  %s29, 256, %s31, [#allocation6], 64, 64, 4
    $region9: #{tpu_custom_call.1} parent=1 // pred_fallthru
      _
    // Predicated region
    $region10: #{tpu_custom_call.1} parent=1 // pred_check
      _
    $region11: #{tpu_custom_call.1} parent=1 // pred_check_branch
      %38 = sbr.rel (0) target = $region13
    $region12: #{tpu_custom_call.1} parent=1 // pred_region
      _
    $region13: #{tpu_custom_call.1} parent=1 // pred_fallthru
      _
    // Predicated region
    $region14: #{tpu_custom_call.1} parent=1 // pred_check
      _
    $region15: #{tpu_custom_call.1} parent=1 // pred_check_branch
      %40 = sbr.rel (0) target = $region17
    $region16: #{tpu_custom_call.1} parent=1 // pred_region
      %42 = vsyncadd [#allocation6], 0
      %s43 = sshll.u32 %s3, 4
      %s44 = int_to_ptr.hbm [resolvable:$true] %s43
      %s45 = sshll.u32 [#allocation7], 4
      %s46 = int_to_ptr.vmem [resolvable:$true] %s45
      %51 = dma.hbm_to_vmem [thread:$0]  %s44, 256, %s46, [#allocation6], 64, 64, 4
    $region17: #{tpu_custom_call.1} parent=1 // pred_fallthru
      _
    // Predicated region
    $region18: #{tpu_custom_call.1} parent=1 // pred_check
      _
    $region19: #{tpu_custom_call.1} parent=1 // pred_check_branch
      %53 = sbr.rel (0) target = $region21
    $region20: #{tpu_custom_call.1} parent=1 // pred_region
      _
    $region21: #{tpu_custom_call.1} parent=1 // pred_fallthru
      _
    // Predicated region
    $region22: #{tpu_custom_call.1} parent=1 // pred_check
      _
    $region23: #{tpu_custom_call.1} parent=1 // pred_check_branch
      %55 = sbr.rel (0) target = $region25
    $region24: #{tpu_custom_call.1} parent=1 // pred_region
      %57 = dma.done [#allocation3], 128
    $region25: #{tpu_custom_call.1} parent=1 // pred_fallthru
      _
    // Predicated region
    $region26: #{tpu_custom_call.1} parent=1 // pred_check
      _
    $region27: #{tpu_custom_call.1} parent=1 // pred_check_branch
      %59 = sbr.rel (0) target = $region29
    $region28: #{tpu_custom_call.1} parent=1 // pred_region
      %61 = dma.done [#allocation6], 256
    $region29: #{tpu_custom_call.1} parent=1 // pred_fallthru
      _
    // Predicated region
    $region30: #{tpu_custom_call.1} parent=1 // pred_check
      _
    $region31: #{tpu_custom_call.1} parent=1 // pred_check_branch
      %63 = sbr.rel (0) target = $region33
    $region32: #{tpu_custom_call.1} parent=1 // pred_region
      %65 = dma.done [#allocation6], 256
    $region33: #{tpu_custom_call.1} parent=1 // pred_fallthru
      _
    %v67 = vld [vmem:[#allocation2] sm:$0xff]
    %v68 = vmax.f32 %v67, 0.0
    %v69 = vpack.c.bf16 %v68, %v68
    %v70 = vld [vmem:[#allocation5] sm:$0xf]
    %v71 = vld [vmem:[#allocation5 + $0x4] sm:$0xf]
    %v72 = vld [vmem:[#allocation5 + $0x8] sm:$0xf]
    %v73 = vld [vmem:[#allocation5 + $0xc] sm:$0xf]
    %v74 = vld [vmem:[%s2] sm:$0x1]
    %v76 = vperm.slane %v74, 0
    %v82 = vunpack.c.l.b16 %v70
    %v83 = vunpack.c.l.b16 %v71
    %v84 = vunpack.c.l.b16 %v72
    %v85 = vunpack.c.l.b16 %v73
    %v86 = vpack.c.b16 %v83, %v82
    %v87 = vpack.c.b16 %v85, %v84
    %vm90 = vcmask 261120
    %v92 = vsel %vm90, %v69, 0
    %94 = vmatpush.bf16.msra.mxu0 0
    %95 = vmatpush.bf16.msra.mxu0 0
    %96 = vmatpush.bf16.msra.mxu0 0
    %97 = vmatpush.bf16.msra.mxu0 0
    %98 = vmatpush.bf16.msra.mxu0 0
    %99 = vmatpush.bf16.msra.mxu0 0
    %100 = vmatpush.bf16.msra.mxu0 %v87
    %101 = vmatpush.bf16.msra.mxu0 %v86
    %102 = vmatmul.bf16.gmra.mxu0 %v92
    %v103 = vpop.f32.mrf.mxu0
    %v104 = vadd.f32 %v76, %v103
    %v105 = vpop.f32.mrf.mxu0
    %106 = vdwg.mxu0
    %v107 = vmax.f32 %v104, 0.0
    %v108 = vpack.c.bf16 %v107, %v107
    %v109 = vld [vmem:[#allocation7] sm:$0xf]
    %v110 = vld [vmem:[#allocation7 + $0x4] sm:$0xf]
    %v111 = vld [vmem:[#allocation7 + $0x8] sm:$0xf]
    %v112 = vld [vmem:[#allocation7 + $0xc] sm:$0xf]
    %v113 = vld [vmem:[%s4] sm:$0x1]
    %v115 = vperm.slane %v113, 0
    %v121 = vunpack.c.l.b16 %v109
    %v122 = vunpack.c.l.b16 %v110
    %v123 = vunpack.c.l.b16 %v111
    %v124 = vunpack.c.l.b16 %v112
    %v125 = vpack.c.b16 %v122, %v121
    %v126 = vpack.c.b16 %v124, %v123
    %v130 = vsel %vm90, %v108, 0
    %132 = vmatpush.bf16.msra.mxu0 0
    %133 = vmatpush.bf16.msra.mxu0 0
    %134 = vmatpush.bf16.msra.mxu0 0
    %135 = vmatpush.bf16.msra.mxu0 0
    %136 = vmatpush.bf16.msra.mxu0 0
    %137 = vmatpush.bf16.msra.mxu0 0
    %138 = vmatpush.bf16.msra.mxu0 %v126
    %139 = vmatpush.bf16.msra.mxu0 %v125
    %140 = vmatmul.bf16.gmra.mxu0 %v130
    %v141 = vpop.f32.mrf.mxu0
    %v142 = vadd.f32 %v115, %v141
    %v143 = vpop.f32.mrf.mxu0
    %144 = vdwg.mxu0
    %145 = vmax.xlane.f32.xlu0 %v142
    %v146 = vpop.xlane.xlu0 %145
    %v147 = vsub.f32 %v142, %v146
    %v148 = vmul.f32 %v147, 1.442695
    %v149 = vpow.pop %v148
    %150 = vadd.xlane.f32.xlu0 %v149
    %v151 = vpop.xlane.xlu0 %150
    %v152 = vrcp.pop %v151
    %v153 = vmul.f32 %v149, %v152
    %154 = vst [vmem:[#allocation8] sm:$0xff] %v153
    // Predicated region
    $region34: #{tpu_custom_call.1} parent=1 // pred_check
      _
    $region35: #{tpu_custom_call.1} parent=1 // pred_check_branch
      %156 = sbr.rel (0) target = $region37
    $region36: #{tpu_custom_call.1} parent=1 // pred_region
      %158 = vsyncadd [#allocation4], 0
      %s160 = sshll.u32 [#allocation8], 4
      %s161 = int_to_ptr.vmem [resolvable:$true] %s160
      %s162 = sshll.u32 %s5, 4
      %s163 = int_to_ptr.hbm [resolvable:$true] %s162
      %165 = dma.vmem_to_hbm [thread:$0]  %s161, 128, %s163, [#allocation4]
    $region37: #{tpu_custom_call.1} parent=1 // pred_fallthru
      _
    // Predicated region
    $region38: #{tpu_custom_call.1} parent=1 // pred_check
      _
    $region39: #{tpu_custom_call.1} parent=1 // pred_check_branch
      %167 = sbr.rel (0) target = $region41
    $region40: #{tpu_custom_call.1} parent=1 // pred_region
      %169 = dma.done [#allocation4], 128
    $region41: #{tpu_custom_call.1} parent=1 // pred_fallthru
      _
    %170 = vsyncpa [#allocation3], 1
    %171 = vsyncpa [#allocation6], 1
    %172 = vsyncpa [#allocation4], 1

</llo_original>
